<compile_context>
chip_gen: v7x
topology: tpu7x:2x2x1
jax: 0.10.0
libtpu: 0.0.40
codegen_flags: <defaults>
</compile_context>

<pallas_src>
import functools

import jax
import jax.numpy as jnp
import numpy as np
from jax.experimental import pallas as pl
from jax.experimental.pallas import tpu as pltpu

B_TILE = 8      # sublane-native batch tile
LANE = 128      # lane width


def _round_up(x, m):
    return (x + m - 1) // m * m


def gru_fc_kernel(x_ref, w_ih_ref, w_hh_ref, b_gi_ref, b_gh_ref,
                  w_fc_ref, b_fc_ref, out_ref):
    # x_ref:   (S, Bt, I)  time-major batch tile
    # w_ih_ref:(I, 3H)   w_hh_ref:(H, 3H)   gate order [r, z, n]
    # b_gi_ref:(1, 3H) = [b_ih_r+b_hh_r, b_ih_z+b_hh_z, b_ih_n]
    # b_gh_ref:(1, 3H) = [0, 0, b_hh_n]
    # w_fc_ref:(H, O_pad)  b_fc_ref:(1, O_pad)  out_ref:(Bt, O_pad)
    S, Bt, I = x_ref.shape
    H = w_hh_ref.shape[0]

    w_hh = w_hh_ref[...]
    b_gh = b_gh_ref[...]

    # Hoisted input projection: a single MXU matmul over all timesteps,
    # off the serial h-dependency chain.  Biases (fully folded for r/z,
    # b_ih for n) are added here once.
    x_all = x_ref[...].reshape(S * Bt, I)                          # (S*Bt, I)
    gi_all = (jnp.dot(x_all, w_ih_ref[...],
                      preferred_element_type=jnp.float32)
              + b_gi_ref[...])                                     # (S*Bt, 3H)

    # Static unroll of the short recurrence: lets the scheduler overlap
    # MXU / EUP (sigmoid, tanh) / VPU work across timesteps.
    h = jnp.zeros((Bt, H), jnp.float32)
    for t in range(S):
        gi = gi_all[t * Bt:(t + 1) * Bt, :]                        # (Bt, 3H)
        gh = jnp.dot(h, w_hh, preferred_element_type=jnp.float32) + b_gh
        r = jax.nn.sigmoid(gi[:, 0:H] + gh[:, 0:H])
        z = jax.nn.sigmoid(gi[:, H:2 * H] + gh[:, H:2 * H])
        n = jnp.tanh(gi[:, 2 * H:3 * H] + r * gh[:, 2 * H:3 * H])
        h = n + z * (h - n)                                        # == (1-z)n + z h

    out_ref[...] = (jnp.dot(h, w_fc_ref[...],
                            preferred_element_type=jnp.float32)
                    + b_fc_ref[...])


def prepare_params(params):
    """One-time layout prep: transpose/cast weights, fold biases, pad fc."""
    H = params["w_hh"].shape[1]
    O = params["w_fc"].shape[0]
    O_pad = _round_up(O, LANE)

    w_ih_t = jnp.transpose(params["w_ih"]).astype(jnp.float32)     # (I, 3H)
    w_hh_t = jnp.transpose(params["w_hh"]).astype(jnp.float32)     # (H, 3H)
    b_ih = params["b_ih"].astype(jnp.float32)
    b_hh = params["b_hh"].astype(jnp.float32)
    b_gi = jnp.concatenate([b_ih[0:H] + b_hh[0:H],
                            b_ih[H:2 * H] + b_hh[H:2 * H],
                            b_ih[2 * H:3 * H]]).reshape(1, 3 * H)
    b_gh = jnp.concatenate([jnp.zeros((2 * H,), jnp.float32),
                            b_hh[2 * H:3 * H]]).reshape(1, 3 * H)

    w_fc_t = jnp.transpose(params["w_fc"]).astype(jnp.float32)     # (H, O)
    w_fc_p = jnp.zeros((H, O_pad), jnp.float32).at[:, :O].set(w_fc_t)
    b_fc_p = jnp.zeros((1, O_pad), jnp.float32).at[0, :O].set(
        params["b_fc"].astype(jnp.float32))

    return {"w_ih_t": w_ih_t, "w_hh_t": w_hh_t, "b_gi": b_gi, "b_gh": b_gh,
            "w_fc_p": w_fc_p, "b_fc_p": b_fc_p}


@functools.partial(jax.jit, static_argnames=("out_dim",))
def gru_model_forward(x, prep, out_dim):
    """x: (B, S, I) float32 -> (B, out_dim) float32."""
    B, S, I = x.shape
    H = prep["w_hh_t"].shape[0]
    G = 3 * H
    O_pad = prep["w_fc_p"].shape[1]
    B_pad = _round_up(B, B_TILE)

    # time-major layout + pad batch to the native 8-sublane tile
    x_tm = jnp.transpose(x.astype(jnp.float32), (1, 0, 2))          # (S, B, I)
    x_tm = jnp.pad(x_tm, ((0, 0), (0, B_pad - B), (0, 0)))          # (S, Bp, I)

    n_btiles = B_pad // B_TILE

    flops = (2 * S * B_pad * I * G            # hoisted input projection
             + 2 * S * B_pad * H * G          # recurrent matmuls
             + 2 * B_pad * H * O_pad)         # fc
    transcendentals = S * B_pad * G
    bytes_accessed = 4 * (S * B_pad * I + I * G + H * G + 2 * G
                          + H * O_pad + O_pad + B_pad * O_pad)

    out = pl.pallas_call(
        gru_fc_kernel,
        out_shape=jax.ShapeDtypeStruct((B_pad, O_pad), jnp.float32),
        grid=(n_btiles,),
        in_specs=[
            pl.BlockSpec((S, B_TILE, I), lambda b: (0, b, 0)),
            pl.BlockSpec((I, G), lambda b: (0, 0)),
            pl.BlockSpec((H, G), lambda b: (0, 0)),
            pl.BlockSpec((1, G), lambda b: (0, 0)),
            pl.BlockSpec((1, G), lambda b: (0, 0)),
            pl.BlockSpec((H, O_pad), lambda b: (0, 0)),
            pl.BlockSpec((1, O_pad), lambda b: (0, 0)),
        ],
        out_specs=pl.BlockSpec((B_TILE, O_pad), lambda b: (b, 0)),
        compiler_params=pltpu.CompilerParams(
            dimension_semantics=("parallel",)),
        cost_estimate=pl.CostEstimate(flops=flops,
                                      transcendentals=transcendentals,
                                      bytes_accessed=bytes_accessed),
    )(x_tm, prep["w_ih_t"], prep["w_hh_t"], prep["b_gi"], prep["b_gh"],
      prep["w_fc_p"], prep["b_fc_p"])

    return out[:B, :out_dim]


def gru_model_reference(x, params):
    """Pure-JAX reference of torch.nn.GRU(batch_first) + Linear on hn."""
    B, S, I = x.shape
    H = params["w_hh"].shape[1]
    h = jnp.zeros((B, H), jnp.float32)
    for t in range(S):
        x_t = x[:, t, :]
        gi = x_t @ params["w_ih"].T + params["b_ih"]
        gh = h @ params["w_hh"].T + params["b_hh"]
        r = jax.nn.sigmoid(gi[:, :H] + gh[:, :H])
        z = jax.nn.sigmoid(gi[:, H:2 * H] + gh[:, H:2 * H])
        n = jnp.tanh(gi[:, 2 * H:] + r * gh[:, 2 * H:])
        h = (1.0 - z) * n + z * h
    return h @ params["w_fc"].T + params["b_fc"]


def init_params(key, input_dim, hidden_num, output_dim):
    k = 1.0 / np.sqrt(hidden_num)
    keys = jax.random.split(key, 6)
    uni = lambda kk, shape: jax.random.uniform(kk, shape, jnp.float32, -k, k)
    return {
        "w_ih": uni(keys[0], (3 * hidden_num, input_dim)),
        "w_hh": uni(keys[1], (3 * hidden_num, hidden_num)),
        "b_ih": uni(keys[2], (3 * hidden_num,)),
        "b_hh": uni(keys[3], (3 * hidden_num,)),
        "w_fc": uni(keys[4], (output_dim, hidden_num)),
        "b_fc": uni(keys[5], (output_dim,)),
    }


if __name__ == "__main__":
    # GRUModel(inputDim=4, hiddenNum=32, outputDim=1, layerNum=1, cell='GRU')
    batch, seq, input_dim, hidden_num, output_dim = 2, 8, 4, 32, 1

    key = jax.random.PRNGKey(0)
    k_x, k_p = jax.random.split(key)
    x = jax.random.normal(k_x, (batch, seq, input_dim), jnp.float32)
    params = init_params(k_p, input_dim, hidden_num, output_dim)

    prep = prepare_params(params)          # one-time weight layout prep
    out = gru_model_forward(x, prep, output_dim)
    out = jax.block_until_ready(out)

    ref = gru_model_reference(x, params)
    np.testing.assert_allclose(np.asarray(out), np.asarray(ref),
                               rtol=1e-4, atol=1e-4)
    print("KERNEL_OK")
</pallas_src>

<mosaic_0001>
module attributes {stable_mosaic.version = 11 : i64} {
  func.func @gru_fc_kernel(%arg0: i32, %arg1: memref<8x8x4xf32, #tpu.memory_space<vmem>>, %arg2: memref<4x96xf32, #tpu.memory_space<vmem>>, %arg3: memref<32x96xf32, #tpu.memory_space<vmem>>, %arg4: memref<1x96xf32, #tpu.memory_space<vmem>>, %arg5: memref<1x96xf32, #tpu.memory_space<vmem>>, %arg6: memref<32x128xf32, #tpu.memory_space<vmem>>, %arg7: memref<1x128xf32, #tpu.memory_space<vmem>>, %arg8: memref<8x128xf32, #tpu.memory_space<vmem>>) attributes {dimension_semantics = [#tpu.dimension_semantics<parallel>], iteration_bounds = array<i64: 1>, scalar_prefetch = 0 : i64, scratch_operands = 0 : i64, tpu.core_type = #tpu.core_type<tc>, window_params = [{transform_indices = @transform_0, window_bounds = array<i64: 8, 8, 4>}, {pipeline_mode = #tpu.pipeline_mode<synchronous>, transform_indices = @transform_1, window_bounds = array<i64: 4, 96>}, {pipeline_mode = #tpu.pipeline_mode<synchronous>, transform_indices = @transform_2, window_bounds = array<i64: 32, 96>}, {pipeline_mode = #tpu.pipeline_mode<synchronous>, transform_indices = @transform_3, window_bounds = array<i64: 1, 96>}, {pipeline_mode = #tpu.pipeline_mode<synchronous>, transform_indices = @transform_4, window_bounds = array<i64: 1, 96>}, {pipeline_mode = #tpu.pipeline_mode<synchronous>, transform_indices = @transform_5, window_bounds = array<i64: 32, 128>}, {pipeline_mode = #tpu.pipeline_mode<synchronous>, transform_indices = @transform_6, window_bounds = array<i64: 1, 128>}, {transform_indices = @transform_7, window_bounds = array<i64: 8, 128>}]} {
    %c0 = arith.constant 0 : index
    %c0_0 = arith.constant 0 : index
    %0 = vector.load %arg3[%c0, %c0_0] : memref<32x96xf32, #tpu.memory_space<vmem>>, vector<32x96xf32>
    %c0_1 = arith.constant 0 : index
    %c0_2 = arith.constant 0 : index
    %1 = vector.load %arg5[%c0_1, %c0_2] : memref<1x96xf32, #tpu.memory_space<vmem>>, vector<1x96xf32>
    %c0_3 = arith.constant 0 : index
    %c0_4 = arith.constant 0 : index
    %c0_5 = arith.constant 0 : index
    %2 = vector.load %arg1[%c0_3, %c0_4, %c0_5] : memref<8x8x4xf32, #tpu.memory_space<vmem>>, vector<8x8x4xf32>
    %3 = vector.shape_cast %2 : vector<8x8x4xf32> to vector<64x4xf32>
    %c0_6 = arith.constant 0 : index
    %c0_7 = arith.constant 0 : index
    %4 = vector.load %arg2[%c0_6, %c0_7] : memref<4x96xf32, #tpu.memory_space<vmem>>, vector<4x96xf32>
    %cst = arith.constant dense<0.000000e+00> : vector<64x96xf32>
    %5 = tpu.matmul %3, %4, %cst {dimension_numbers = #tpu.dot_dimension_numbers<[1], [0], [0], [1], [0, 0, 1, 1], [], []>} : vector<64x4xf32>, vector<4x96xf32>, vector<64x96xf32> -> vector<64x96xf32>
    %c0_8 = arith.constant 0 : index
    %c0_9 = arith.constant 0 : index
    %6 = vector.load %arg4[%c0_8, %c0_9] : memref<1x96xf32, #tpu.memory_space<vmem>>, vector<1x96xf32>
    %7 = vector.broadcast %6 : vector<1x96xf32> to vector<64x96xf32>
    %8 = arith.addf %5, %7 : vector<64x96xf32>
    %cst_10 = arith.constant 0.000000e+00 : f32
    %9 = vector.broadcast %cst_10 : f32 to vector<8x32xf32>
    %10 = vector.extract_strided_slice %8 {offsets = [0, 0], sizes = [8, 96], strides = [1, 1]} : vector<64x96xf32> to vector<8x96xf32>
    %cst_11 = arith.constant dense<0.000000e+00> : vector<8x96xf32>
    %11 = tpu.matmul %9, %0, %cst_11 {dimension_numbers = #tpu.dot_dimension_numbers<[1], [0], [0], [1], [0, 0, 1, 1], [], []>} : vector<8x32xf32>, vector<32x96xf32>, vector<8x96xf32> -> vector<8x96xf32>
    %12 = vector.broadcast %1 : vector<1x96xf32> to vector<8x96xf32>
    %13 = arith.addf %11, %12 : vector<8x96xf32>
    %14 = vector.extract_strided_slice %10 {offsets = [0, 0], sizes = [8, 32], strides = [1, 1]} : vector<8x96xf32> to vector<8x32xf32>
    %15 = vector.extract_strided_slice %13 {offsets = [0, 0], sizes = [8, 32], strides = [1, 1]} : vector<8x96xf32> to vector<8x32xf32>
    %16 = arith.addf %14, %15 : vector<8x32xf32>
    %17 = arith.negf %16 : vector<8x32xf32>
    %18 = math.exp %17 : vector<8x32xf32>
    %cst_12 = arith.constant 1.000000e+00 : f32
    %19 = vector.broadcast %cst_12 : f32 to vector<8x32xf32>
    %20 = arith.addf %19, %18 : vector<8x32xf32>
    %21 = arith.divf %19, %20 : vector<8x32xf32>
    %22 = vector.extract_strided_slice %10 {offsets = [0, 32], sizes = [8, 32], strides = [1, 1]} : vector<8x96xf32> to vector<8x32xf32>
    %23 = vector.extract_strided_slice %13 {offsets = [0, 32], sizes = [8, 32], strides = [1, 1]} : vector<8x96xf32> to vector<8x32xf32>
    %24 = arith.addf %22, %23 : vector<8x32xf32>
    %25 = arith.negf %24 : vector<8x32xf32>
    %26 = math.exp %25 : vector<8x32xf32>
    %cst_13 = arith.constant 1.000000e+00 : f32
    %27 = vector.broadcast %cst_13 : f32 to vector<8x32xf32>
    %28 = arith.addf %27, %26 : vector<8x32xf32>
    %29 = arith.divf %27, %28 : vector<8x32xf32>
    %30 = vector.extract_strided_slice %10 {offsets = [0, 64], sizes = [8, 32], strides = [1, 1]} : vector<8x96xf32> to vector<8x32xf32>
    %31 = vector.extract_strided_slice %13 {offsets = [0, 64], sizes = [8, 32], strides = [1, 1]} : vector<8x96xf32> to vector<8x32xf32>
    %32 = arith.mulf %21, %31 : vector<8x32xf32>
    %33 = arith.addf %30, %32 : vector<8x32xf32>
    %34 = math.tanh %33 : vector<8x32xf32>
    %35 = arith.subf %9, %34 : vector<8x32xf32>
    %36 = arith.mulf %29, %35 : vector<8x32xf32>
    %37 = arith.addf %34, %36 : vector<8x32xf32>
    %38 = vector.extract_strided_slice %8 {offsets = [8, 0], sizes = [8, 96], strides = [1, 1]} : vector<64x96xf32> to vector<8x96xf32>
    %cst_14 = arith.constant dense<0.000000e+00> : vector<8x96xf32>
    %39 = tpu.matmul %37, %0, %cst_14 {dimension_numbers = #tpu.dot_dimension_numbers<[1], [0], [0], [1], [0, 0, 1, 1], [], []>} : vector<8x32xf32>, vector<32x96xf32>, vector<8x96xf32> -> vector<8x96xf32>
    %40 = vector.broadcast %1 : vector<1x96xf32> to vector<8x96xf32>
    %41 = arith.addf %39, %40 : vector<8x96xf32>
    %42 = vector.extract_strided_slice %38 {offsets = [0, 0], sizes = [8, 32], strides = [1, 1]} : vector<8x96xf32> to vector<8x32xf32>
    %43 = vector.extract_strided_slice %41 {offsets = [0, 0], sizes = [8, 32], strides = [1, 1]} : vector<8x96xf32> to vector<8x32xf32>
    %44 = arith.addf %42, %43 : vector<8x32xf32>
    %45 = arith.negf %44 : vector<8x32xf32>
    %46 = math.exp %45 : vector<8x32xf32>
    %cst_15 = arith.constant 1.000000e+00 : f32
    %47 = vector.broadcast %cst_15 : f32 to vector<8x32xf32>
    %48 = arith.addf %47, %46 : vector<8x32xf32>
    %49 = arith.divf %47, %48 : vector<8x32xf32>
    %50 = vector.extract_strided_slice %38 {offsets = [0, 32], sizes = [8, 32], strides = [1, 1]} : vector<8x96xf32> to vector<8x32xf32>
    %51 = vector.extract_strided_slice %41 {offsets = [0, 32], sizes = [8, 32], strides = [1, 1]} : vector<8x96xf32> to vector<8x32xf32>
    %52 = arith.addf %50, %51 : vector<8x32xf32>
    %53 = arith.negf %52 : vector<8x32xf32>
    %54 = math.exp %53 : vector<8x32xf32>
    %cst_16 = arith.constant 1.000000e+00 : f32
    %55 = vector.broadcast %cst_16 : f32 to vector<8x32xf32>
    %56 = arith.addf %55, %54 : vector<8x32xf32>
    %57 = arith.divf %55, %56 : vector<8x32xf32>
    %58 = vector.extract_strided_slice %38 {offsets = [0, 64], sizes = [8, 32], strides = [1, 1]} : vector<8x96xf32> to vector<8x32xf32>
    %59 = vector.extract_strided_slice %41 {offsets = [0, 64], sizes = [8, 32], strides = [1, 1]} : vector<8x96xf32> to vector<8x32xf32>
    %60 = arith.mulf %49, %59 : vector<8x32xf32>
    %61 = arith.addf %58, %60 : vector<8x32xf32>
    %62 = math.tanh %61 : vector<8x32xf32>
    %63 = arith.subf %37, %62 : vector<8x32xf32>
    %64 = arith.mulf %57, %63 : vector<8x32xf32>
    %65 = arith.addf %62, %64 : vector<8x32xf32>
    %66 = vector.extract_strided_slice %8 {offsets = [16, 0], sizes = [8, 96], strides = [1, 1]} : vector<64x96xf32> to vector<8x96xf32>
    %cst_17 = arith.constant dense<0.000000e+00> : vector<8x96xf32>
    %67 = tpu.matmul %65, %0, %cst_17 {dimension_numbers = #tpu.dot_dimension_numbers<[1], [0], [0], [1], [0, 0, 1, 1], [], []>} : vector<8x32xf32>, vector<32x96xf32>, vector<8x96xf32> -> vector<8x96xf32>
    %68 = vector.broadcast %1 : vector<1x96xf32> to vector<8x96xf32>
    %69 = arith.addf %67, %68 : vector<8x96xf32>
    %70 = vector.extract_strided_slice %66 {offsets = [0, 0], sizes = [8, 32], strides = [1, 1]} : vector<8x96xf32> to vector<8x32xf32>
    %71 = vector.extract_strided_slice %69 {offsets = [0, 0], sizes = [8, 32], strides = [1, 1]} : vector<8x96xf32> to vector<8x32xf32>
    %72 = arith.addf %70, %71 : vector<8x32xf32>
    %73 = arith.negf %72 : vector<8x32xf32>
    %74 = math.exp %73 : vector<8x32xf32>
    %cst_18 = arith.constant 1.000000e+00 : f32
    %75 = vector.broadcast %cst_18 : f32 to vector<8x32xf32>
    %76 = arith.addf %75, %74 : vector<8x32xf32>
    %77 = arith.divf %75, %76 : vector<8x32xf32>
    %78 = vector.extract_strided_slice %66 {offsets = [0, 32], sizes = [8, 32], strides = [1, 1]} : vector<8x96xf32> to vector<8x32xf32>
    %79 = vector.extract_strided_slice %69 {offsets = [0, 32], sizes = [8, 32], strides = [1, 1]} : vector<8x96xf32> to vector<8x32xf32>
    %80 = arith.addf %78, %79 : vector<8x32xf32>
    %81 = arith.negf %80 : vector<8x32xf32>
    %82 = math.exp %81 : vector<8x32xf32>
    %cst_19 = arith.constant 1.000000e+00 : f32
    %83 = vector.broadcast %cst_19 : f32 to vector<8x32xf32>
    %84 = arith.addf %83, %82 : vector<8x32xf32>
    %85 = arith.divf %83, %84 : vector<8x32xf32>
    %86 = vector.extract_strided_slice %66 {offsets = [0, 64], sizes = [8, 32], strides = [1, 1]} : vector<8x96xf32> to vector<8x32xf32>
    %87 = vector.extract_strided_slice %69 {offsets = [0, 64], sizes = [8, 32], strides = [1, 1]} : vector<8x96xf32> to vector<8x32xf32>
    %88 = arith.mulf %77, %87 : vector<8x32xf32>
    %89 = arith.addf %86, %88 : vector<8x32xf32>
    %90 = math.tanh %89 : vector<8x32xf32>
    %91 = arith.subf %65, %90 : vector<8x32xf32>
    %92 = arith.mulf %85, %91 : vector<8x32xf32>
    %93 = arith.addf %90, %92 : vector<8x32xf32>
    %94 = vector.extract_strided_slice %8 {offsets = [24, 0], sizes = [8, 96], strides = [1, 1]} : vector<64x96xf32> to vector<8x96xf32>
    %cst_20 = arith.constant dense<0.000000e+00> : vector<8x96xf32>
    %95 = tpu.matmul %93, %0, %cst_20 {dimension_numbers = #tpu.dot_dimension_numbers<[1], [0], [0], [1], [0, 0, 1, 1], [], []>} : vector<8x32xf32>, vector<32x96xf32>, vector<8x96xf32> -> vector<8x96xf32>
    %96 = vector.broadcast %1 : vector<1x96xf32> to vector<8x96xf32>
    %97 = arith.addf %95, %96 : vector<8x96xf32>
    %98 = vector.extract_strided_slice %94 {offsets = [0, 0], sizes = [8, 32], strides = [1, 1]} : vector<8x96xf32> to vector<8x32xf32>
    %99 = vector.extract_strided_slice %97 {offsets = [0, 0], sizes = [8, 32], strides = [1, 1]} : vector<8x96xf32> to vector<8x32xf32>
    %100 = arith.addf %98, %99 : vector<8x32xf32>
    %101 = arith.negf %100 : vector<8x32xf32>
    %102 = math.exp %101 : vector<8x32xf32>
    %cst_21 = arith.constant 1.000000e+00 : f32
    %103 = vector.broadcast %cst_21 : f32 to vector<8x32xf32>
    %104 = arith.addf %103, %102 : vector<8x32xf32>
    %105 = arith.divf %103, %104 : vector<8x32xf32>
    %106 = vector.extract_strided_slice %94 {offsets = [0, 32], sizes = [8, 32], strides = [1, 1]} : vector<8x96xf32> to vector<8x32xf32>
    %107 = vector.extract_strided_slice %97 {offsets = [0, 32], sizes = [8, 32], strides = [1, 1]} : vector<8x96xf32> to vector<8x32xf32>
    %108 = arith.addf %106, %107 : vector<8x32xf32>
    %109 = arith.negf %108 : vector<8x32xf32>
    %110 = math.exp %109 : vector<8x32xf32>
    %cst_22 = arith.constant 1.000000e+00 : f32
    %111 = vector.broadcast %cst_22 : f32 to vector<8x32xf32>
    %112 = arith.addf %111, %110 : vector<8x32xf32>
    %113 = arith.divf %111, %112 : vector<8x32xf32>
    %114 = vector.extract_strided_slice %94 {offsets = [0, 64], sizes = [8, 32], strides = [1, 1]} : vector<8x96xf32> to vector<8x32xf32>
    %115 = vector.extract_strided_slice %97 {offsets = [0, 64], sizes = [8, 32], strides = [1, 1]} : vector<8x96xf32> to vector<8x32xf32>
    %116 = arith.mulf %105, %115 : vector<8x32xf32>
    %117 = arith.addf %114, %116 : vector<8x32xf32>
    %118 = math.tanh %117 : vector<8x32xf32>
    %119 = arith.subf %93, %118 : vector<8x32xf32>
    %120 = arith.mulf %113, %119 : vector<8x32xf32>
    %121 = arith.addf %118, %120 : vector<8x32xf32>
    %122 = vector.extract_strided_slice %8 {offsets = [32, 0], sizes = [8, 96], strides = [1, 1]} : vector<64x96xf32> to vector<8x96xf32>
    %cst_23 = arith.constant dense<0.000000e+00> : vector<8x96xf32>
    %123 = tpu.matmul %121, %0, %cst_23 {dimension_numbers = #tpu.dot_dimension_numbers<[1], [0], [0], [1], [0, 0, 1, 1], [], []>} : vector<8x32xf32>, vector<32x96xf32>, vector<8x96xf32> -> vector<8x96xf32>
    %124 = vector.broadcast %1 : vector<1x96xf32> to vector<8x96xf32>
    %125 = arith.addf %123, %124 : vector<8x96xf32>
    %126 = vector.extract_strided_slice %122 {offsets = [0, 0], sizes = [8, 32], strides = [1, 1]} : vector<8x96xf32> to vector<8x32xf32>
    %127 = vector.extract_strided_slice %125 {offsets = [0, 0], sizes = [8, 32], strides = [1, 1]} : vector<8x96xf32> to vector<8x32xf32>
    %128 = arith.addf %126, %127 : vector<8x32xf32>
    %129 = arith.negf %128 : vector<8x32xf32>
    %130 = math.exp %129 : vector<8x32xf32>
    %cst_24 = arith.constant 1.000000e+00 : f32
    %131 = vector.broadcast %cst_24 : f32 to vector<8x32xf32>
    %132 = arith.addf %131, %130 : vector<8x32xf32>
    %133 = arith.divf %131, %132 : vector<8x32xf32>
    %134 = vector.extract_strided_slice %122 {offsets = [0, 32], sizes = [8, 32], strides = [1, 1]} : vector<8x96xf32> to vector<8x32xf32>
    %135 = vector.extract_strided_slice %125 {offsets = [0, 32], sizes = [8, 32], strides = [1, 1]} : vector<8x96xf32> to vector<8x32xf32>
    %136 = arith.addf %134, %135 : vector<8x32xf32>
    %137 = arith.negf %136 : vector<8x32xf32>
    %138 = math.exp %137 : vector<8x32xf32>
    %cst_25 = arith.constant 1.000000e+00 : f32
    %139 = vector.broadcast %cst_25 : f32 to vector<8x32xf32>
    %140 = arith.addf %139, %138 : vector<8x32xf32>
    %141 = arith.divf %139, %140 : vector<8x32xf32>
    %142 = vector.extract_strided_slice %122 {offsets = [0, 64], sizes = [8, 32], strides = [1, 1]} : vector<8x96xf32> to vector<8x32xf32>
    %143 = vector.extract_strided_slice %125 {offsets = [0, 64], sizes = [8, 32], strides = [1, 1]} : vector<8x96xf32> to vector<8x32xf32>
    %144 = arith.mulf %133, %143 : vector<8x32xf32>
    %145 = arith.addf %142, %144 : vector<8x32xf32>
    %146 = math.tanh %145 : vector<8x32xf32>
    %147 = arith.subf %121, %146 : vector<8x32xf32>
    %148 = arith.mulf %141, %147 : vector<8x32xf32>
    %149 = arith.addf %146, %148 : vector<8x32xf32>
    %150 = vector.extract_strided_slice %8 {offsets = [40, 0], sizes = [8, 96], strides = [1, 1]} : vector<64x96xf32> to vector<8x96xf32>
    %cst_26 = arith.constant dense<0.000000e+00> : vector<8x96xf32>
    %151 = tpu.matmul %149, %0, %cst_26 {dimension_numbers = #tpu.dot_dimension_numbers<[1], [0], [0], [1], [0, 0, 1, 1], [], []>} : vector<8x32xf32>, vector<32x96xf32>, vector<8x96xf32> -> vector<8x96xf32>
    %152 = vector.broadcast %1 : vector<1x96xf32> to vector<8x96xf32>
    %153 = arith.addf %151, %152 : vector<8x96xf32>
    %154 = vector.extract_strided_slice %150 {offsets = [0, 0], sizes = [8, 32], strides = [1, 1]} : vector<8x96xf32> to vector<8x32xf32>
    %155 = vector.extract_strided_slice %153 {offsets = [0, 0], sizes = [8, 32], strides = [1, 1]} : vector<8x96xf32> to vector<8x32xf32>
    %156 = arith.addf %154, %155 : vector<8x32xf32>
    %157 = arith.negf %156 : vector<8x32xf32>
    %158 = math.exp %157 : vector<8x32xf32>
    %cst_27 = arith.constant 1.000000e+00 : f32
    %159 = vector.broadcast %cst_27 : f32 to vector<8x32xf32>
    %160 = arith.addf %159, %158 : vector<8x32xf32>
    %161 = arith.divf %159, %160 : vector<8x32xf32>
    %162 = vector.extract_strided_slice %150 {offsets = [0, 32], sizes = [8, 32], strides = [1, 1]} : vector<8x96xf32> to vector<8x32xf32>
    %163 = vector.extract_strided_slice %153 {offsets = [0, 32], sizes = [8, 32], strides = [1, 1]} : vector<8x96xf32> to vector<8x32xf32>
    %164 = arith.addf %162, %163 : vector<8x32xf32>
    %165 = arith.negf %164 : vector<8x32xf32>
    %166 = math.exp %165 : vector<8x32xf32>
    %cst_28 = arith.constant 1.000000e+00 : f32
    %167 = vector.broadcast %cst_28 : f32 to vector<8x32xf32>
    %168 = arith.addf %167, %166 : vector<8x32xf32>
    %169 = arith.divf %167, %168 : vector<8x32xf32>
    %170 = vector.extract_strided_slice %150 {offsets = [0, 64], sizes = [8, 32], strides = [1, 1]} : vector<8x96xf32> to vector<8x32xf32>
    %171 = vector.extract_strided_slice %153 {offsets = [0, 64], sizes = [8, 32], strides = [1, 1]} : vector<8x96xf32> to vector<8x32xf32>
    %172 = arith.mulf %161, %171 : vector<8x32xf32>
    %173 = arith.addf %170, %172 : vector<8x32xf32>
    %174 = math.tanh %173 : vector<8x32xf32>
    %175 = arith.subf %149, %174 : vector<8x32xf32>
    %176 = arith.mulf %169, %175 : vector<8x32xf32>
    %177 = arith.addf %174, %176 : vector<8x32xf32>
    %178 = vector.extract_strided_slice %8 {offsets = [48, 0], sizes = [8, 96], strides = [1, 1]} : vector<64x96xf32> to vector<8x96xf32>
    %cst_29 = arith.constant dense<0.000000e+00> : vector<8x96xf32>
    %179 = tpu.matmul %177, %0, %cst_29 {dimension_numbers = #tpu.dot_dimension_numbers<[1], [0], [0], [1], [0, 0, 1, 1], [], []>} : vector<8x32xf32>, vector<32x96xf32>, vector<8x96xf32> -> vector<8x96xf32>
    %180 = vector.broadcast %1 : vector<1x96xf32> to vector<8x96xf32>
    %181 = arith.addf %179, %180 : vector<8x96xf32>
    %182 = vector.extract_strided_slice %178 {offsets = [0, 0], sizes = [8, 32], strides = [1, 1]} : vector<8x96xf32> to vector<8x32xf32>
    %183 = vector.extract_strided_slice %181 {offsets = [0, 0], sizes = [8, 32], strides = [1, 1]} : vector<8x96xf32> to vector<8x32xf32>
    %184 = arith.addf %182, %183 : vector<8x32xf32>
    %185 = arith.negf %184 : vector<8x32xf32>
    %186 = math.exp %185 : vector<8x32xf32>
    %cst_30 = arith.constant 1.000000e+00 : f32
    %187 = vector.broadcast %cst_30 : f32 to vector<8x32xf32>
    %188 = arith.addf %187, %186 : vector<8x32xf32>
    %189 = arith.divf %187, %188 : vector<8x32xf32>
    %190 = vector.extract_strided_slice %178 {offsets = [0, 32], sizes = [8, 32], strides = [1, 1]} : vector<8x96xf32> to vector<8x32xf32>
    %191 = vector.extract_strided_slice %181 {offsets = [0, 32], sizes = [8, 32], strides = [1, 1]} : vector<8x96xf32> to vector<8x32xf32>
    %192 = arith.addf %190, %191 : vector<8x32xf32>
    %193 = arith.negf %192 : vector<8x32xf32>
    %194 = math.exp %193 : vector<8x32xf32>
    %cst_31 = arith.constant 1.000000e+00 : f32
    %195 = vector.broadcast %cst_31 : f32 to vector<8x32xf32>
    %196 = arith.addf %195, %194 : vector<8x32xf32>
    %197 = arith.divf %195, %196 : vector<8x32xf32>
    %198 = vector.extract_strided_slice %178 {offsets = [0, 64], sizes = [8, 32], strides = [1, 1]} : vector<8x96xf32> to vector<8x32xf32>
    %199 = vector.extract_strided_slice %181 {offsets = [0, 64], sizes = [8, 32], strides = [1, 1]} : vector<8x96xf32> to vector<8x32xf32>
    %200 = arith.mulf %189, %199 : vector<8x32xf32>
    %201 = arith.addf %198, %200 : vector<8x32xf32>
    %202 = math.tanh %201 : vector<8x32xf32>
    %203 = arith.subf %177, %202 : vector<8x32xf32>
    %204 = arith.mulf %197, %203 : vector<8x32xf32>
    %205 = arith.addf %202, %204 : vector<8x32xf32>
    %206 = vector.extract_strided_slice %8 {offsets = [56, 0], sizes = [8, 96], strides = [1, 1]} : vector<64x96xf32> to vector<8x96xf32>
    %cst_32 = arith.constant dense<0.000000e+00> : vector<8x96xf32>
    %207 = tpu.matmul %205, %0, %cst_32 {dimension_numbers = #tpu.dot_dimension_numbers<[1], [0], [0], [1], [0, 0, 1, 1], [], []>} : vector<8x32xf32>, vector<32x96xf32>, vector<8x96xf32> -> vector<8x96xf32>
    %208 = vector.broadcast %1 : vector<1x96xf32> to vector<8x96xf32>
    %209 = arith.addf %207, %208 : vector<8x96xf32>
    %210 = vector.extract_strided_slice %206 {offsets = [0, 0], sizes = [8, 32], strides = [1, 1]} : vector<8x96xf32> to vector<8x32xf32>
    %211 = vector.extract_strided_slice %209 {offsets = [0, 0], sizes = [8, 32], strides = [1, 1]} : vector<8x96xf32> to vector<8x32xf32>
    %212 = arith.addf %210, %211 : vector<8x32xf32>
    %213 = arith.negf %212 : vector<8x32xf32>
    %214 = math.exp %213 : vector<8x32xf32>
    %cst_33 = arith.constant 1.000000e+00 : f32
    %215 = vector.broadcast %cst_33 : f32 to vector<8x32xf32>
    %216 = arith.addf %215, %214 : vector<8x32xf32>
    %217 = arith.divf %215, %216 : vector<8x32xf32>
    %218 = vector.extract_strided_slice %206 {offsets = [0, 32], sizes = [8, 32], strides = [1, 1]} : vector<8x96xf32> to vector<8x32xf32>
    %219 = vector.extract_strided_slice %209 {offsets = [0, 32], sizes = [8, 32], strides = [1, 1]} : vector<8x96xf32> to vector<8x32xf32>
    %220 = arith.addf %218, %219 : vector<8x32xf32>
    %221 = arith.negf %220 : vector<8x32xf32>
    %222 = math.exp %221 : vector<8x32xf32>
    %cst_34 = arith.constant 1.000000e+00 : f32
    %223 = vector.broadcast %cst_34 : f32 to vector<8x32xf32>
    %224 = arith.addf %223, %222 : vector<8x32xf32>
    %225 = arith.divf %223, %224 : vector<8x32xf32>
    %226 = vector.extract_strided_slice %206 {offsets = [0, 64], sizes = [8, 32], strides = [1, 1]} : vector<8x96xf32> to vector<8x32xf32>
    %227 = vector.extract_strided_slice %209 {offsets = [0, 64], sizes = [8, 32], strides = [1, 1]} : vector<8x96xf32> to vector<8x32xf32>
    %228 = arith.mulf %217, %227 : vector<8x32xf32>
    %229 = arith.addf %226, %228 : vector<8x32xf32>
    %230 = math.tanh %229 : vector<8x32xf32>
    %231 = arith.subf %205, %230 : vector<8x32xf32>
    %232 = arith.mulf %225, %231 : vector<8x32xf32>
    %233 = arith.addf %230, %232 : vector<8x32xf32>
    %c0_35 = arith.constant 0 : index
    %c0_36 = arith.constant 0 : index
    %234 = vector.load %arg6[%c0_35, %c0_36] : memref<32x128xf32, #tpu.memory_space<vmem>>, vector<32x128xf32>
    %cst_37 = arith.constant dense<0.000000e+00> : vector<8x128xf32>
    %235 = tpu.matmul %233, %234, %cst_37 {dimension_numbers = #tpu.dot_dimension_numbers<[1], [0], [0], [1], [0, 0, 1, 1], [], []>} : vector<8x32xf32>, vector<32x128xf32>, vector<8x128xf32> -> vector<8x128xf32>
    %c0_38 = arith.constant 0 : index
    %c0_39 = arith.constant 0 : index
    %236 = vector.load %arg7[%c0_38, %c0_39] : memref<1x128xf32, #tpu.memory_space<vmem>>, vector<1x128xf32>
    %237 = vector.broadcast %236 : vector<1x128xf32> to vector<8x128xf32>
    %238 = arith.addf %235, %237 : vector<8x128xf32>
    %c0_40 = arith.constant 0 : index
    %c0_41 = arith.constant 0 : index
    %239 = vector.load %arg8[%c0_40, %c0_41] : memref<8x128xf32, #tpu.memory_space<vmem>>, vector<8x128xf32>
    tpu.vector_store %arg8[%c0_40, %c0_41], %238 {strides = array<i32>} : memref<8x128xf32, #tpu.memory_space<vmem>>, vector<8x128xf32>,
    return
  }
  func.func @transform_0(%arg0: i32) -> (i32, i32, i32) {
    %c0_i32 = arith.constant 0 : i32
    %c0_i32_0 = arith.constant 0 : i32
    %c0_i32_1 = arith.constant 0 : i32
    return %c0_i32, %arg0, %c0_i32_0 : i32, i32, i32
  }
  func.func @transform_1(%arg0: i32) -> (i32, i32) {
    %c0_i32 = arith.constant 0 : i32
    %c0_i32_0 = arith.constant 0 : i32
    %c0_i32_1 = arith.constant 0 : i32
    return %c0_i32, %c0_i32_0 : i32, i32
  }
  func.func @transform_2(%arg0: i32) -> (i32, i32) {
    %c0_i32 = arith.constant 0 : i32
    %c0_i32_0 = arith.constant 0 : i32
    %c0_i32_1 = arith.constant 0 : i32
    return %c0_i32, %c0_i32_0 : i32, i32
  }
  func.func @transform_3(%arg0: i32) -> (i32, i32) {
    %c0_i32 = arith.constant 0 : i32
    %c0_i32_0 = arith.constant 0 : i32
    %c0_i32_1 = arith.constant 0 : i32
    return %c0_i32, %c0_i32_0 : i32, i32
  }
  func.func @transform_4(%arg0: i32) -> (i32, i32) {
    %c0_i32 = arith.constant 0 : i32
    %c0_i32_0 = arith.constant 0 : i32
    %c0_i32_1 = arith.constant 0 : i32
    return %c0_i32, %c0_i32_0 : i32, i32
  }
  func.func @transform_5(%arg0: i32) -> (i32, i32) {
    %c0_i32 = arith.constant 0 : i32
    %c0_i32_0 = arith.constant 0 : i32
    %c0_i32_1 = arith.constant 0 : i32
    return %c0_i32, %c0_i32_0 : i32, i32
  }
  func.func @transform_6(%arg0: i32) -> (i32, i32) {
    %c0_i32 = arith.constant 0 : i32
    %c0_i32_0 = arith.constant 0 : i32
    %c0_i32_1 = arith.constant 0 : i32
    return %c0_i32, %c0_i32_0 : i32, i32
  }
  func.func @transform_7(%arg0: i32) -> (i32, i32) {
    %c0_i32 = arith.constant 0 : i32
    %c0_i32_0 = arith.constant 0 : i32
    return %arg0, %c0_i32 : i32, i32
  }
}

</mosaic_0001>

<llo_original>
// kernel: gru_model_forward.1
$region0: #{gru_model_forward.1}
  #allocation0 [shape = 'u32[]', space=smem, size = 0x4, offset = 0x4, fixed_abs, tag = 'smem constant byte address 0x4 - core index']
  #allocation1 [shape = 'u32[144,128]{1,0:T(1,128)}', space=vmem, size = 0x12000, scoped, tag = 'internal scratch']
  %s0 = inlined_call_operand.vmem [shape: f32[8,8,4], index: 0, kind: input, shape index: {}]
  %s1 = inlined_call_operand.vmem [shape: f32[4,96], index: 1, kind: input, shape index: {}]
  %s2 = inlined_call_operand.vmem [shape: f32[32,96], index: 2, kind: input, shape index: {}]
  %s3 = inlined_call_operand.vmem [shape: f32[1,96], index: 3, kind: input, shape index: {}]
  %s4 = inlined_call_operand.vmem [shape: f32[1,96], index: 4, kind: input, shape index: {}]
  %s5 = inlined_call_operand.vmem [shape: f32[32,128], index: 5, kind: input, shape index: {}]
  %s6 = inlined_call_operand.vmem [shape: f32[1,128], index: 6, kind: input, shape index: {}]
  %s7 = inlined_call_operand.vmem [shape: f32[8,128], index: 7, kind: output, shape index: {}]
  %s8 = sld [smem:[#allocation0]]
  $region38: #{gru_model_forward.1} parent=0
    _
  %s10 = ssub.s32 1, %s8
  %s11 = scalar_select 0, %s10, %s8
  // Predicated region
  $region2: #{gru_model_forward.1} parent=0 // pred_check
    _
  $region3: #{gru_model_forward.1} parent=0 // pred_check_branch
    %13 = sbr.rel (0) target = $region5
  $region4: #{gru_model_forward.1} parent=0 // pred_region
    _
  $region5: #{gru_model_forward.1} parent=0 // pred_fallthru
    _
  // Predicated region
  $region6: #{gru_model_forward.1} parent=0 // pred_check
    _
  $region7: #{gru_model_forward.1} parent=0 // pred_check_branch
    %15 = sbr.rel (0) target = $region9
  $region8: #{gru_model_forward.1} parent=0 // pred_region
    _
  $region9: #{gru_model_forward.1} parent=0 // pred_fallthru
    _
  // Predicated region
  $region10: #{gru_model_forward.1} parent=0 // pred_check
    _
  $region11: #{gru_model_forward.1} parent=0 // pred_check_branch
    %17 = sbr.rel (0) target = $region13
  $region12: #{gru_model_forward.1} parent=0 // pred_region
    _
  $region13: #{gru_model_forward.1} parent=0 // pred_fallthru
    _
  // Predicated region
  $region14: #{gru_model_forward.1} parent=0 // pred_check
    _
  $region15: #{gru_model_forward.1} parent=0 // pred_check_branch
    %19 = sbr.rel (0) target = $region17
  $region16: #{gru_model_forward.1} parent=0 // pred_region
    _
  $region17: #{gru_model_forward.1} parent=0 // pred_fallthru
    _
  // Predicated region
  $region18: #{gru_model_forward.1} parent=0 // pred_check
    _
  $region19: #{gru_model_forward.1} parent=0 // pred_check_branch
    %21 = sbr.rel (0) target = $region21
  $region20: #{gru_model_forward.1} parent=0 // pred_region
    _
  $region21: #{gru_model_forward.1} parent=0 // pred_fallthru
    _
  // Predicated region
  $region22: #{gru_model_forward.1} parent=0 // pred_check
    _
  $region23: #{gru_model_forward.1} parent=0 // pred_check_branch
    %23 = sbr.rel (0) target = $region25
  $region24: #{gru_model_forward.1} parent=0 // pred_region
    _
  $region25: #{gru_model_forward.1} parent=0 // pred_fallthru
    _
  // Predicated region
  $region26: #{gru_model_forward.1} parent=0 // pred_check
    _
  $region27: #{gru_model_forward.1} parent=0 // pred_check_branch
    %25 = sbr.rel (0) target = $region29
  $region28: #{gru_model_forward.1} parent=0 // pred_region
    _
  $region29: #{gru_model_forward.1} parent=0 // pred_fallthru
    _
  %v26 = vld [vmem:[%s2] sm:$0xff]
  %v27 = vld [vmem:[%s2 + $0x8] sm:$0xff]
  %v28 = vld [vmem:[%s2 + $0x10] sm:$0xff]
  %v29 = vld [vmem:[%s2 + $0x18] sm:$0xff]
  %v30 = vld [vmem:[%s4] sm:$0x1]
  %v31 = vld [vmem:[%s0] sm:$0xff]
  %v32 = vld [vmem:[%s0 + $0x8] sm:$0xff]
  %v33 = vld [vmem:[%s0 + $0x10] sm:$0xff]
  %v34 = vld [vmem:[%s0 + $0x18] sm:$0xff]
  %v35 = vld [vmem:[%s0 + $0x20] sm:$0xff]
  %v36 = vld [vmem:[%s0 + $0x28] sm:$0xff]
  %v37 = vld [vmem:[%s0 + $0x30] sm:$0xff]
  %v38 = vld [vmem:[%s0 + $0x38] sm:$0xff]
  %v39 = vld [vmem:[%s1] sm:$0xf]
  %v40 = vld [vmem:[%s3] sm:$0x1]
  %v42 = vlaneseq
  %v43 = vshrl.u32 %v42, 7
  %v44 = vsub.s32 0, %v43
  %v45 = vrot.slane %v40, %v44
  %vm47 = vcmask 31744
  %v49 = vsel %vm47, %v31, 0
  %v52 = vsel %vm47, %v32, 0
  %v55 = vsel %vm47, %v33, 0
  %v58 = vsel %vm47, %v34, 0
  %v61 = vsel %vm47, %v35, 0
  %v64 = vsel %vm47, %v36, 0
  %v67 = vsel %vm47, %v37, 0
  %v70 = vsel %vm47, %v38, 0
  %vm72 = vcmask 1043456
  %v74 = vsel %vm72, %v39, 0
  %76 = vmatprep.subr.mxu0 0.0
  %77 = vmatpush1.msra.mxu0 %v74
  %78 = vmatprep.subr.mxu0 0.0
  %79 = vmatpush1.msra.mxu0 0.0
  %80 = vmatprep.subr.mxu0 0.0
  %81 = vmatpush1.msra.mxu0 0.0
  %82 = vmatprep.subr.mxu0 0.0
  %83 = vmatpush1.msra.mxu0 0.0
  %84 = vmatprep.subr.mxu0 0.0
  %85 = vmatpush1.msra.mxu0 0.0
  %86 = vmatprep.subr.mxu0 0.0
  %87 = vmatpush1.msra.mxu0 0.0
  %88 = vmatprep.subr.mxu0 0.0
  %89 = vmatpush1.msra.mxu0 0.0
  %90 = vmatprep.subr.mxu0 0.0
  %91 = vmatpush1.msra.mxu0 0.0
  %92 = vmatprep.subr.mxu0 0.0
  %93 = vmatpush1.msra.mxu0 0.0
  %94 = vmatprep.subr.mxu0 0.0
  %95 = vmatpush1.msra.mxu0 0.0
  %96 = vmatprep.subr.mxu0 0.0
  %97 = vmatpush1.msra.mxu0 0.0
  %98 = vmatprep.subr.mxu0 0.0
  %99 = vmatpush1.msra.mxu0 0.0
  %100 = vmatprep.subr.mxu0 0.0
  %101 = vmatpush1.msra.mxu0 0.0
  %102 = vmatprep.subr.mxu0 0.0
  %103 = vmatpush1.msra.mxu0 0.0
  %104 = vmatprep.subr.mxu0 0.0
  %105 = vmatpush1.msra.mxu0 0.0
  %106 = vmatprep.subr.mxu0 0.0
  %107 = vmatpush1.msra.mxu0 0.0
  %108 = vmatprep.subr.mxu0 0.0
  %109 = vmatpush1.msra.mxu0 0.0
  %110 = vmatprep.subr.mxu0 0.0
  %111 = vmatpush1.msra.mxu0 0.0
  %112 = vmatprep.subr.mxu0 0.0
  %113 = vmatpush1.msra.mxu0 0.0
  %114 = vmatprep.subr.mxu0 0.0
  %115 = vmatpush1.msra.mxu0 0.0
  %116 = vmatprep.subr.mxu0 0.0
  %117 = vmatpush1.msra.mxu0 0.0
  %118 = vmatprep.subr.mxu0 0.0
  %119 = vmatpush1.msra.mxu0 0.0
  %120 = vmatprep.subr.mxu0 0.0
  %121 = vmatpush1.msra.mxu0 0.0
  %122 = vmatprep.subr.mxu0 0.0
  %123 = vmatpush1.msra.mxu0 0.0
  %124 = vmatprep.subr.mxu0 0.0
  %125 = vmatpush1.msra.mxu0 0.0
  %126 = vmatprep.subr.mxu0 0.0
  %127 = vmatpush1.msra.mxu0 0.0
  %128 = vmatprep.subr.mxu0 0.0
  %129 = vmatpush1.msra.mxu0 0.0
  %130 = vmatprep.subr.mxu0 0.0
  %131 = vmatpush1.msra.mxu0 0.0
  %132 = vmatprep.subr.mxu0 0.0
  %133 = vmatpush1.msra.mxu0 0.0
  %134 = vmatprep.subr.mxu0 0.0
  %135 = vmatpush1.msra.mxu0 0.0
  %136 = vmatprep.subr.mxu0 0.0
  %137 = vmatpush1.msra.mxu0 0.0
  %138 = vmatprep.subr.mxu0 0.0
  %139 = vmatpush1.msra.mxu0 0.0
  %140 = vmatprep.mubr.f32.mxu0 0.0
  %141 = vmatmul.mubr.f32.gmra.mrb[0].mxu0 %v49
  %v142 = vpop.f32.mrb[0].mxu0
  %v143 = vadd.f32 %v45, %v142
  %v144 = vpop.f32.mrb[0].mxu0
  %145 = vmatprep.mubr.f32.mxu0 0.0
  %146 = vmatmul.mubr.f32.gmra.mrb[0].mxu0 %v52
  %v147 = vpop.f32.mrb[0].mxu0
  %v148 = vadd.f32 %v45, %v147
  %v149 = vpop.f32.mrb[0].mxu0
  %150 = vmatprep.mubr.f32.mxu0 0.0
  %151 = vmatmul.mubr.f32.gmra.mrb[0].mxu0 %v55
  %v152 = vpop.f32.mrb[0].mxu0
  %v153 = vadd.f32 %v45, %v152
  %v154 = vpop.f32.mrb[0].mxu0
  %155 = vmatprep.mubr.f32.mxu0 0.0
  %156 = vmatmul.mubr.f32.gmra.mrb[0].mxu0 %v58
  %v157 = vpop.f32.mrb[0].mxu0
  %v158 = vadd.f32 %v45, %v157
  %v159 = vpop.f32.mrb[0].mxu0
  %160 = vmatprep.mubr.f32.mxu0 0.0
  %161 = vmatmul.mubr.f32.gmra.mrb[0].mxu0 %v61
  %v162 = vpop.f32.mrb[0].mxu0
  %v163 = vadd.f32 %v45, %v162
  %v164 = vpop.f32.mrb[0].mxu0
  %165 = vmatprep.mubr.f32.mxu0 0.0
  %166 = vmatmul.mubr.f32.gmra.mrb[0].mxu0 %v64
  %v167 = vpop.f32.mrb[0].mxu0
  %v168 = vadd.f32 %v45, %v167
  %v169 = vpop.f32.mrb[0].mxu0
  %170 = vmatprep.mubr.f32.mxu0 0.0
  %171 = vmatmul.mubr.f32.gmra.mrb[0].mxu0 %v67
  %v172 = vpop.f32.mrb[0].mxu0
  %v173 = vadd.f32 %v45, %v172
  %v174 = vpop.f32.mrb[0].mxu0
  %175 = vmatprep.mubr.f32.mxu0 0.0
  %176 = vmatmul.mubr.f32.gmra.mrb[0].mxu0 %v70
  %v177 = vpop.f32.mrb[0].mxu0
  %v178 = vadd.f32 %v45, %v177
  %v179 = vpop.f32.mrb[0].mxu0
  %180 = vdwg.mxu0
  %v182 = vlaneseq
  %v183 = vshrl.u32 %v182, 7
  %v184 = vsub.s32 0, %v183
  %v185 = vrot.slane %v30, %v184
  %vm187 = vcmask 261120
  %v189 = vsel %vm187, 0.0, 0
  %191 = vmatprep.subr.mxu0 0.0
  %192 = vmatpush1.msra.mxu0 %v26
  %193 = vmatprep.subr.mxu0 0.0
  %194 = vmatpush1.msra.mxu0 %v27
  %195 = vmatprep.subr.mxu0 0.0
  %196 = vmatpush1.msra.mxu0 %v28
  %197 = vmatprep.subr.mxu0 0.0
  %198 = vmatpush1.msra.mxu0 %v29
  %199 = vmatprep.subr.mxu0 0.0
  %200 = vmatpush1.msra.mxu0 0.0
  %201 = vmatprep.subr.mxu0 0.0
  %202 = vmatpush1.msra.mxu0 0.0
  %203 = vmatprep.subr.mxu0 0.0
  %204 = vmatpush1.msra.mxu0 0.0
  %205 = vmatprep.subr.mxu0 0.0
  %206 = vmatpush1.msra.mxu0 0.0
  %207 = vmatprep.subr.mxu0 0.0
  %208 = vmatpush1.msra.mxu0 0.0
  %209 = vmatprep.subr.mxu0 0.0
  %210 = vmatpush1.msra.mxu0 0.0
  %211 = vmatprep.subr.mxu0 0.0
  %212 = vmatpush1.msra.mxu0 0.0
  %213 = vmatprep.subr.mxu0 0.0
  %214 = vmatpush1.msra.mxu0 0.0
  %215 = vmatprep.subr.mxu0 0.0
  %216 = vmatpush1.msra.mxu0 0.0
  %217 = vmatprep.subr.mxu0 0.0
  %218 = vmatpush1.msra.mxu0 0.0
  %219 = vmatprep.subr.mxu0 0.0
  %220 = vmatpush1.msra.mxu0 0.0
  %221 = vmatprep.subr.mxu0 0.0
  %222 = vmatpush1.msra.mxu0 0.0
  %223 = vmatprep.subr.mxu0 0.0
  %224 = vmatpush1.msra.mxu0 0.0
  %225 = vmatprep.subr.mxu0 0.0
  %226 = vmatpush1.msra.mxu0 0.0
  %227 = vmatprep.subr.mxu0 0.0
  %228 = vmatpush1.msra.mxu0 0.0
  %229 = vmatprep.subr.mxu0 0.0
  %230 = vmatpush1.msra.mxu0 0.0
  %231 = vmatprep.subr.mxu0 0.0
  %232 = vmatpush1.msra.mxu0 0.0
  %233 = vmatprep.subr.mxu0 0.0
  %234 = vmatpush1.msra.mxu0 0.0
  %235 = vmatprep.subr.mxu0 0.0
  %236 = vmatpush1.msra.mxu0 0.0
  %237 = vmatprep.subr.mxu0 0.0
  %238 = vmatpush1.msra.mxu0 0.0
  %239 = vmatprep.subr.mxu0 0.0
  %240 = vmatpush1.msra.mxu0 0.0
  %241 = vmatprep.subr.mxu0 0.0
  %242 = vmatpush1.msra.mxu0 0.0
  %243 = vmatprep.subr.mxu0 0.0
  %244 = vmatpush1.msra.mxu0 0.0
  %245 = vmatprep.subr.mxu0 0.0
  %246 = vmatpush1.msra.mxu0 0.0
  %247 = vmatprep.subr.mxu0 0.0
  %248 = vmatpush1.msra.mxu0 0.0
  %249 = vmatprep.subr.mxu0 0.0
  %250 = vmatpush1.msra.mxu0 0.0
  %251 = vmatprep.subr.mxu0 0.0
  %252 = vmatpush1.msra.mxu0 0.0
  %253 = vmatprep.subr.mxu0 0.0
  %254 = vmatpush1.msra.mxu0 0.0
  %255 = vmatprep.mubr.f32.mxu0 0.0
  %256 = vmatmul.mubr.f32.gmra.mrb[0].mxu0 %v189
  %v257 = vpop.f32.mrb[0].mxu0
  %v258 = vadd.f32 %v185, %v257
  %v259 = vpop.f32.mrb[0].mxu0
  %260 = vdwg.mxu0
  %v261 = vadd.f32 %v143, %v258
  %v262 = vxor.u32 %v261, 2147483648
  %v263 = vmul.f32 %v262, 1.442695
  %v264 = vpow.pop %v263
  %v265 = vadd.f32 %v264, 1.0
  %v266 = vrcp.pop %v265
  %v267 = vmul.f32 1.0, %v266
  %269 = vrot.lane.b32.xlu0 %v258, 64
  %v270 = vpop.permute.xlu0 %269
  %v272 = vmul.f32 %v267, %v270
  %274 = vrot.lane.b32.xlu0 %v272, 64
  %v275 = vpop.permute.xlu0 %274
  %v277 = vadd.f32 %v143, %v275
  %v278 = vtanh.pop %v277
  %v279 = vsub.f32 0.0, %v278
  %281 = vrot.lane.b32.xlu0 %v279, 96
  %v282 = vpop.permute.xlu0 %281
  %v284 = vmul.f32 %v267, %v282
  %286 = vrot.lane.b32.xlu0 %v284, 32
  %v287 = vpop.permute.xlu0 %286
  %v289 = vadd.f32 %v278, %v287
  %291 = vrot.lane.b32.xlu0 %v289, 64
  %v292 = vpop.permute.xlu0 %291
  %v293 = vsel %vm187, %v292, 0
  %295 = vmatprep.subr.mxu0 0.0
  %296 = vmatpush1.msra.mxu0 %v26
  %297 = vmatprep.subr.mxu0 0.0
  %298 = vmatpush1.msra.mxu0 %v27
  %299 = vmatprep.subr.mxu0 0.0
  %300 = vmatpush1.msra.mxu0 %v28
  %301 = vmatprep.subr.mxu0 0.0
  %302 = vmatpush1.msra.mxu0 %v29
  %303 = vmatprep.subr.mxu0 0.0
  %304 = vmatpush1.msra.mxu0 0.0
  %305 = vmatprep.subr.mxu0 0.0
  %306 = vmatpush1.msra.mxu0 0.0
  %307 = vmatprep.subr.mxu0 0.0
  %308 = vmatpush1.msra.mxu0 0.0
  %309 = vmatprep.subr.mxu0 0.0
  %310 = vmatpush1.msra.mxu0 0.0
  %311 = vmatprep.subr.mxu0 0.0
  %312 = vmatpush1.msra.mxu0 0.0
  %313 = vmatprep.subr.mxu0 0.0
  %314 = vmatpush1.msra.mxu0 0.0
  %315 = vmatprep.subr.mxu0 0.0
  %316 = vmatpush1.msra.mxu0 0.0
  %317 = vmatprep.subr.mxu0 0.0
  %318 = vmatpush1.msra.mxu0 0.0
  %319 = vmatprep.subr.mxu0 0.0
  %320 = vmatpush1.msra.mxu0 0.0
  %321 = vmatprep.subr.mxu0 0.0
  %322 = vmatpush1.msra.mxu0 0.0
  %323 = vmatprep.subr.mxu0 0.0
  %324 = vmatpush1.msra.mxu0 0.0
  %325 = vmatprep.subr.mxu0 0.0
  %326 = vmatpush1.msra.mxu0 0.0
  %327 = vmatprep.subr.mxu0 0.0
  %328 = vmatpush1.msra.mxu0 0.0
  %329 = vmatprep.subr.mxu0 0.0
  %330 = vmatpush1.msra.mxu0 0.0
  %331 = vmatprep.subr.mxu0 0.0
  %332 = vmatpush1.msra.mxu0 0.0
  %333 = vmatprep.subr.mxu0 0.0
  %334 = vmatpush1.msra.mxu0 0.0
  %335 = vmatprep.subr.mxu0 0.0
  %336 = vmatpush1.msra.mxu0 0.0
  %337 = vmatprep.subr.mxu0 0.0
  %338 = vmatpush1.msra.mxu0 0.0
  %339 = vmatprep.subr.mxu0 0.0
  %340 = vmatpush1.msra.mxu0 0.0
  %341 = vmatprep.subr.mxu0 0.0
  %342 = vmatpush1.msra.mxu0 0.0
  %343 = vmatprep.subr.mxu0 0.0
  %344 = vmatpush1.msra.mxu0 0.0
  %345 = vmatprep.subr.mxu0 0.0
  %346 = vmatpush1.msra.mxu0 0.0
  %347 = vmatprep.subr.mxu0 0.0
  %348 = vmatpush1.msra.mxu0 0.0
  %349 = vmatprep.subr.mxu0 0.0
  %350 = vmatpush1.msra.mxu0 0.0
  %351 = vmatprep.subr.mxu0 0.0
  %352 = vmatpush1.msra.mxu0 0.0
  %353 = vmatprep.subr.mxu0 0.0
  %354 = vmatpush1.msra.mxu0 0.0
  %355 = vmatprep.subr.mxu0 0.0
  %356 = vmatpush1.msra.mxu0 0.0
  %357 = vmatprep.subr.mxu0 0.0
  %358 = vmatpush1.msra.mxu0 0.0
  %359 = vmatprep.mubr.f32.mxu0 0.0
  %360 = vmatmul.mubr.f32.gmra.mrb[0].mxu0 %v293
  %v361 = vpop.f32.mrb[0].mxu0
  %v362 = vadd.f32 %v185, %v361
  %v363 = vpop.f32.mrb[0].mxu0
  %364 = vdwg.mxu0
  %v365 = vadd.f32 %v148, %v362
  %v366 = vxor.u32 %v365, 2147483648
  %v367 = vmul.f32 %v366, 1.442695
  %v368 = vpow.pop %v367
  %v369 = vadd.f32 %v368, 1.0
  %v370 = vrcp.pop %v369
  %v371 = vmul.f32 1.0, %v370
  %373 = vrot.lane.b32.xlu0 %v362, 64
  %v374 = vpop.permute.xlu0 %373
  %v376 = vmul.f32 %v371, %v374
  %378 = vrot.lane.b32.xlu0 %v376, 64
  %v379 = vpop.permute.xlu0 %378
  %v381 = vadd.f32 %v148, %v379
  %v382 = vtanh.pop %v381
  %v383 = vsub.f32 %v289, %v382
  %385 = vrot.lane.b32.xlu0 %v383, 96
  %v386 = vpop.permute.xlu0 %385
  %v388 = vmul.f32 %v371, %v386
  %390 = vrot.lane.b32.xlu0 %v388, 32
  %v391 = vpop.permute.xlu0 %390
  %v393 = vadd.f32 %v382, %v391
  %395 = vrot.lane.b32.xlu0 %v393, 64
  %v396 = vpop.permute.xlu0 %395
  %v397 = vsel %vm187, %v396, 0
  %399 = vmatprep.subr.mxu0 0.0
  %400 = vmatpush1.msra.mxu0 %v26
  %401 = vmatprep.subr.mxu0 0.0
  %402 = vmatpush1.msra.mxu0 %v27
  %403 = vmatprep.subr.mxu0 0.0
  %404 = vmatpush1.msra.mxu0 %v28
  %405 = vmatprep.subr.mxu0 0.0
  %406 = vmatpush1.msra.mxu0 %v29
  %407 = vmatprep.subr.mxu0 0.0
  %408 = vmatpush1.msra.mxu0 0.0
  %409 = vmatprep.subr.mxu0 0.0
  %410 = vmatpush1.msra.mxu0 0.0
  %411 = vmatprep.subr.mxu0 0.0
  %412 = vmatpush1.msra.mxu0 0.0
  %413 = vmatprep.subr.mxu0 0.0
  %414 = vmatpush1.msra.mxu0 0.0
  %415 = vmatprep.subr.mxu0 0.0
  %416 = vmatpush1.msra.mxu0 0.0
  %417 = vmatprep.subr.mxu0 0.0
  %418 = vmatpush1.msra.mxu0 0.0
  %419 = vmatprep.subr.mxu0 0.0
  %420 = vmatpush1.msra.mxu0 0.0
  %421 = vmatprep.subr.mxu0 0.0
  %422 = vmatpush1.msra.mxu0 0.0
  %423 = vmatprep.subr.mxu0 0.0
  %424 = vmatpush1.msra.mxu0 0.0
  %425 = vmatprep.subr.mxu0 0.0
  %426 = vmatpush1.msra.mxu0 0.0
  %427 = vmatprep.subr.mxu0 0.0
  %428 = vmatpush1.msra.mxu0 0.0
  %429 = vmatprep.subr.mxu0 0.0
  %430 = vmatpush1.msra.mxu0 0.0
  %431 = vmatprep.subr.mxu0 0.0
  %432 = vmatpush1.msra.mxu0 0.0
  %433 = vmatprep.subr.mxu0 0.0
  %434 = vmatpush1.msra.mxu0 0.0
  %435 = vmatprep.subr.mxu0 0.0
  %436 = vmatpush1.msra.mxu0 0.0
  %437 = vmatprep.subr.mxu0 0.0
  %438 = vmatpush1.msra.mxu0 0.0
  %439 = vmatprep.subr.mxu0 0.0
  %440 = vmatpush1.msra.mxu0 0.0
  %441 = vmatprep.subr.mxu0 0.0
  %442 = vmatpush1.msra.mxu0 0.0
  %443 = vmatprep.subr.mxu0 0.0
  %444 = vmatpush1.msra.mxu0 0.0
  %445 = vmatprep.subr.mxu0 0.0
  %446 = vmatpush1.msra.mxu0 0.0
  %447 = vmatprep.subr.mxu0 0.0
  %448 = vmatpush1.msra.mxu0 0.0
  %449 = vmatprep.subr.mxu0 0.0
  %450 = vmatpush1.msra.mxu0 0.0
  %451 = vmatprep.subr.mxu0 0.0
  %452 = vmatpush1.msra.mxu0 0.0
  %453 = vmatprep.subr.mxu0 0.0
  %454 = vmatpush1.msra.mxu0 0.0
  %455 = vmatprep.subr.mxu0 0.0
  %456 = vmatpush1.msra.mxu0 0.0
  %457 = vmatprep.subr.mxu0 0.0
  %458 = vmatpush1.msra.mxu0 0.0
  %459 = vmatprep.subr.mxu0 0.0
  %460 = vmatpush1.msra.mxu0 0.0
  %461 = vmatprep.subr.mxu0 0.0
  %462 = vmatpush1.msra.mxu0 0.0
  %463 = vmatprep.mubr.f32.mxu0 0.0
  %464 = vmatmul.mubr.f32.gmra.mrb[0].mxu0 %v397
  %v465 = vpop.f32.mrb[0].mxu0
  %v466 = vadd.f32 %v185, %v465
  %v467 = vpop.f32.mrb[0].mxu0
  %468 = vdwg.mxu0
  %v469 = vadd.f32 %v153, %v466
  %v470 = vxor.u32 %v469, 2147483648
  %v471 = vmul.f32 %v470, 1.442695
  %v472 = vpow.pop %v471
  %v473 = vadd.f32 %v472, 1.0
  %v474 = vrcp.pop %v473
  %v475 = vmul.f32 1.0, %v474
  %477 = vrot.lane.b32.xlu0 %v466, 64
  %v478 = vpop.permute.xlu0 %477
  %v480 = vmul.f32 %v475, %v478
  %482 = vrot.lane.b32.xlu0 %v480, 64
  %v483 = vpop.permute.xlu0 %482
  %v485 = vadd.f32 %v153, %v483
  %v486 = vtanh.pop %v485
  %v487 = vsub.f32 %v393, %v486
  %489 = vrot.lane.b32.xlu0 %v487, 96
  %v490 = vpop.permute.xlu0 %489
  %v492 = vmul.f32 %v475, %v490
  %494 = vrot.lane.b32.xlu0 %v492, 32
  %v495 = vpop.permute.xlu0 %494
  %v497 = vadd.f32 %v486, %v495
  %499 = vrot.lane.b32.xlu0 %v497, 64
  %v500 = vpop.permute.xlu0 %499
  %v501 = vsel %vm187, %v500, 0
  %503 = vmatprep.subr.mxu0 0.0
  %504 = vmatpush1.msra.mxu0 %v26
  %505 = vmatprep.subr.mxu0 0.0
  %506 = vmatpush1.msra.mxu0 %v27
  %507 = vmatprep.subr.mxu0 0.0
  %508 = vmatpush1.msra.mxu0 %v28
  %509 = vmatprep.subr.mxu0 0.0
  %510 = vmatpush1.msra.mxu0 %v29
  %511 = vmatprep.subr.mxu0 0.0
  %512 = vmatpush1.msra.mxu0 0.0
  %513 = vmatprep.subr.mxu0 0.0
  %514 = vmatpush1.msra.mxu0 0.0
  %515 = vmatprep.subr.mxu0 0.0
  %516 = vmatpush1.msra.mxu0 0.0
  %517 = vmatprep.subr.mxu0 0.0
  %518 = vmatpush1.msra.mxu0 0.0
  %519 = vmatprep.subr.mxu0 0.0
  %520 = vmatpush1.msra.mxu0 0.0
  %521 = vmatprep.subr.mxu0 0.0
  %522 = vmatpush1.msra.mxu0 0.0
  %523 = vmatprep.subr.mxu0 0.0
  %524 = vmatpush1.msra.mxu0 0.0
  %525 = vmatprep.subr.mxu0 0.0
  %526 = vmatpush1.msra.mxu0 0.0
  %527 = vmatprep.subr.mxu0 0.0
  %528 = vmatpush1.msra.mxu0 0.0
  %529 = vmatprep.subr.mxu0 0.0
  %530 = vmatpush1.msra.mxu0 0.0
  %531 = vmatprep.subr.mxu0 0.0
  %532 = vmatpush1.msra.mxu0 0.0
  %533 = vmatprep.subr.mxu0 0.0
  %534 = vmatpush1.msra.mxu0 0.0
  %535 = vmatprep.subr.mxu0 0.0
  %536 = vmatpush1.msra.mxu0 0.0
  %537 = vmatprep.subr.mxu0 0.0
  %538 = vmatpush1.msra.mxu0 0.0
  %539 = vmatprep.subr.mxu0 0.0
  %540 = vmatpush1.msra.mxu0 0.0
  %541 = vmatprep.subr.mxu0 0.0
  %542 = vmatpush1.msra.mxu0 0.0
  %543 = vmatprep.subr.mxu0 0.0
  %544 = vmatpush1.msra.mxu0 0.0
  %545 = vmatprep.subr.mxu0 0.0
  %546 = vmatpush1.msra.mxu0 0.0
  %547 = vmatprep.subr.mxu0 0.0
  %548 = vmatpush1.msra.mxu0 0.0
  %549 = vmatprep.subr.mxu0 0.0
  %550 = vmatpush1.msra.mxu0 0.0
  %551 = vmatprep.subr.mxu0 0.0
  %552 = vmatpush1.msra.mxu0 0.0
  %553 = vmatprep.subr.mxu0 0.0
  %554 = vmatpush1.msra.mxu0 0.0
  %555 = vmatprep.subr.mxu0 0.0
  %556 = vmatpush1.msra.mxu0 0.0
  %557 = vmatprep.subr.mxu0 0.0
  %558 = vmatpush1.msra.mxu0 0.0
  %559 = vmatprep.subr.mxu0 0.0
  %560 = vmatpush1.msra.mxu0 0.0
  %561 = vmatprep.subr.mxu0 0.0
  %562 = vmatpush1.msra.mxu0 0.0
  %563 = vmatprep.subr.mxu0 0.0
  %564 = vmatpush1.msra.mxu0 0.0
  %565 = vmatprep.subr.mxu0 0.0
  %566 = vmatpush1.msra.mxu0 0.0
  %567 = vmatprep.mubr.f32.mxu0 0.0
  %568 = vmatmul.mubr.f32.gmra.mrb[0].mxu0 %v501
  %v569 = vpop.f32.mrb[0].mxu0
  %v570 = vadd.f32 %v185, %v569
  %v571 = vpop.f32.mrb[0].mxu0
  %572 = vdwg.mxu0
  %v573 = vadd.f32 %v158, %v570
  %v574 = vxor.u32 %v573, 2147483648
  %v575 = vmul.f32 %v574, 1.442695
  %v576 = vpow.pop %v575
  %v577 = vadd.f32 %v576, 1.0
  %v578 = vrcp.pop %v577
  %v579 = vmul.f32 1.0, %v578
  %581 = vrot.lane.b32.xlu0 %v570, 64
  %v582 = vpop.permute.xlu0 %581
  %v584 = vmul.f32 %v579, %v582
  %586 = vrot.lane.b32.xlu0 %v584, 64
  %v587 = vpop.permute.xlu0 %586
  %v589 = vadd.f32 %v158, %v587
  %v590 = vtanh.pop %v589
  %v591 = vsub.f32 %v497, %v590
  %593 = vrot.lane.b32.xlu0 %v591, 96
  %v594 = vpop.permute.xlu0 %593
  %v596 = vmul.f32 %v579, %v594
  %598 = vrot.lane.b32.xlu0 %v596, 32
  %v599 = vpop.permute.xlu0 %598
  %v601 = vadd.f32 %v590, %v599
  %603 = vrot.lane.b32.xlu0 %v601, 64
  %v604 = vpop.permute.xlu0 %603
  %v605 = vsel %vm187, %v604, 0
  %607 = vmatprep.subr.mxu0 0.0
  %608 = vmatpush1.msra.mxu0 %v26
  %609 = vmatprep.subr.mxu0 0.0
  %610 = vmatpush1.msra.mxu0 %v27
  %611 = vmatprep.subr.mxu0 0.0
  %612 = vmatpush1.msra.mxu0 %v28
  %613 = vmatprep.subr.mxu0 0.0
  %614 = vmatpush1.msra.mxu0 %v29
  %615 = vmatprep.subr.mxu0 0.0
  %616 = vmatpush1.msra.mxu0 0.0
  %617 = vmatprep.subr.mxu0 0.0
  %618 = vmatpush1.msra.mxu0 0.0
  %619 = vmatprep.subr.mxu0 0.0
  %620 = vmatpush1.msra.mxu0 0.0
  %621 = vmatprep.subr.mxu0 0.0
  %622 = vmatpush1.msra.mxu0 0.0
  %623 = vmatprep.subr.mxu0 0.0
  %624 = vmatpush1.msra.mxu0 0.0
  %625 = vmatprep.subr.mxu0 0.0
  %626 = vmatpush1.msra.mxu0 0.0
  %627 = vmatprep.subr.mxu0 0.0
  %628 = vmatpush1.msra.mxu0 0.0
  %629 = vmatprep.subr.mxu0 0.0
  %630 = vmatpush1.msra.mxu0 0.0
  %631 = vmatprep.subr.mxu0 0.0
  %632 = vmatpush1.msra.mxu0 0.0
  %633 = vmatprep.subr.mxu0 0.0
  %634 = vmatpush1.msra.mxu0 0.0
  %635 = vmatprep.subr.mxu0 0.0
  %636 = vmatpush1.msra.mxu0 0.0
  %637 = vmatprep.subr.mxu0 0.0
  %638 = vmatpush1.msra.mxu0 0.0
  %639 = vmatprep.subr.mxu0 0.0
  %640 = vmatpush1.msra.mxu0 0.0
  %641 = vmatprep.subr.mxu0 0.0
  %642 = vmatpush1.msra.mxu0 0.0
  %643 = vmatprep.subr.mxu0 0.0
  %644 = vmatpush1.msra.mxu0 0.0
  %645 = vmatprep.subr.mxu0 0.0
  %646 = vmatpush1.msra.mxu0 0.0
  %647 = vmatprep.subr.mxu0 0.0
  %648 = vmatpush1.msra.mxu0 0.0
  %649 = vmatprep.subr.mxu0 0.0
  %650 = vmatpush1.msra.mxu0 0.0
  %651 = vmatprep.subr.mxu0 0.0
  %652 = vmatpush1.msra.mxu0 0.0
  %653 = vmatprep.subr.mxu0 0.0
  %654 = vmatpush1.msra.mxu0 0.0
  %655 = vmatprep.subr.mxu0 0.0
  %656 = vmatpush1.msra.mxu0 0.0
  %657 = vmatprep.subr.mxu0 0.0
  %658 = vmatpush1.msra.mxu0 0.0
  %659 = vmatprep.subr.mxu0 0.0
  %660 = vmatpush1.msra.mxu0 0.0
  %661 = vmatprep.subr.mxu0 0.0
  %662 = vmatpush1.msra.mxu0 0.0
  %663 = vmatprep.subr.mxu0 0.0
  %664 = vmatpush1.msra.mxu0 0.0
  %665 = vmatprep.subr.mxu0 0.0
  %666 = vmatpush1.msra.mxu0 0.0
  %667 = vmatprep.subr.mxu0 0.0
  %668 = vmatpush1.msra.mxu0 0.0
  %669 = vmatprep.subr.mxu0 0.0
  %670 = vmatpush1.msra.mxu0 0.0
  %671 = vmatprep.mubr.f32.mxu0 0.0
  %672 = vmatmul.mubr.f32.gmra.mrb[0].mxu0 %v605
  %v673 = vpop.f32.mrb[0].mxu0
  %v674 = vadd.f32 %v185, %v673
  %v675 = vpop.f32.mrb[0].mxu0
  %676 = vdwg.mxu0
  %v677 = vadd.f32 %v163, %v674
  %v678 = vxor.u32 %v677, 2147483648
  %v679 = vmul.f32 %v678, 1.442695
  %v680 = vpow.pop %v679
  %v681 = vadd.f32 %v680, 1.0
  %v682 = vrcp.pop %v681
  %v683 = vmul.f32 1.0, %v682
  %685 = vrot.lane.b32.xlu0 %v674, 64
  %v686 = vpop.permute.xlu0 %685
  %v688 = vmul.f32 %v683, %v686
  %690 = vrot.lane.b32.xlu0 %v688, 64
  %v691 = vpop.permute.xlu0 %690
  %v693 = vadd.f32 %v163, %v691
  %v694 = vtanh.pop %v693
  %v695 = vsub.f32 %v601, %v694
  %697 = vrot.lane.b32.xlu0 %v695, 96
  %v698 = vpop.permute.xlu0 %697
  %v700 = vmul.f32 %v683, %v698
  %702 = vrot.lane.b32.xlu0 %v700, 32
  %v703 = vpop.permute.xlu0 %702
  %v705 = vadd.f32 %v694, %v703
  %707 = vrot.lane.b32.xlu0 %v705, 64
  %v708 = vpop.permute.xlu0 %707
  %v709 = vsel %vm187, %v708, 0
  %711 = vmatprep.subr.mxu0 0.0
  %712 = vmatpush1.msra.mxu0 %v26
  %713 = vmatprep.subr.mxu0 0.0
  %714 = vmatpush1.msra.mxu0 %v27
  %715 = vmatprep.subr.mxu0 0.0
  %716 = vmatpush1.msra.mxu0 %v28
  %717 = vmatprep.subr.mxu0 0.0
  %718 = vmatpush1.msra.mxu0 %v29
  %719 = vmatprep.subr.mxu0 0.0
  %720 = vmatpush1.msra.mxu0 0.0
  %721 = vmatprep.subr.mxu0 0.0
  %722 = vmatpush1.msra.mxu0 0.0
  %723 = vmatprep.subr.mxu0 0.0
  %724 = vmatpush1.msra.mxu0 0.0
  %725 = vmatprep.subr.mxu0 0.0
  %726 = vmatpush1.msra.mxu0 0.0
  %727 = vmatprep.subr.mxu0 0.0
  %728 = vmatpush1.msra.mxu0 0.0
  %729 = vmatprep.subr.mxu0 0.0
  %730 = vmatpush1.msra.mxu0 0.0
  %731 = vmatprep.subr.mxu0 0.0
  %732 = vmatpush1.msra.mxu0 0.0
  %733 = vmatprep.subr.mxu0 0.0
  %734 = vmatpush1.msra.mxu0 0.0
  %735 = vmatprep.subr.mxu0 0.0
  %736 = vmatpush1.msra.mxu0 0.0
  %737 = vmatprep.subr.mxu0 0.0
  %738 = vmatpush1.msra.mxu0 0.0
  %739 = vmatprep.subr.mxu0 0.0
  %740 = vmatpush1.msra.mxu0 0.0
  %741 = vmatprep.subr.mxu0 0.0
  %742 = vmatpush1.msra.mxu0 0.0
  %743 = vmatprep.subr.mxu0 0.0
  %744 = vmatpush1.msra.mxu0 0.0
  %745 = vmatprep.subr.mxu0 0.0
  %746 = vmatpush1.msra.mxu0 0.0
  %747 = vmatprep.subr.mxu0 0.0
  %748 = vmatpush1.msra.mxu0 0.0
  %749 = vmatprep.subr.mxu0 0.0
  %750 = vmatpush1.msra.mxu0 0.0
  %751 = vmatprep.subr.mxu0 0.0
  %752 = vmatpush1.msra.mxu0 0.0
  %753 = vmatprep.subr.mxu0 0.0
  %754 = vmatpush1.msra.mxu0 0.0
  %755 = vmatprep.subr.mxu0 0.0
  %756 = vmatpush1.msra.mxu0 0.0
  %757 = vmatprep.subr.mxu0 0.0
  %758 = vmatpush1.msra.mxu0 0.0
  %759 = vmatprep.subr.mxu0 0.0
  %760 = vmatpush1.msra.mxu0 0.0
  %761 = vmatprep.subr.mxu0 0.0
  %762 = vmatpush1.msra.mxu0 0.0
  %763 = vmatprep.subr.mxu0 0.0
  %764 = vmatpush1.msra.mxu0 0.0
  %765 = vmatprep.subr.mxu0 0.0
  %766 = vmatpush1.msra.mxu0 0.0
  %767 = vmatprep.subr.mxu0 0.0
  %768 = vmatpush1.msra.mxu0 0.0
  %769 = vmatprep.subr.mxu0 0.0
  %770 = vmatpush1.msra.mxu0 0.0
  %771 = vmatprep.subr.mxu0 0.0
  %772 = vmatpush1.msra.mxu0 0.0
  %773 = vmatprep.subr.mxu0 0.0
  %774 = vmatpush1.msra.mxu0 0.0
  %775 = vmatprep.mubr.f32.mxu0 0.0
  %776 = vmatmul.mubr.f32.gmra.mrb[0].mxu0 %v709
  %v777 = vpop.f32.mrb[0].mxu0
  %v778 = vadd.f32 %v185, %v777
  %v779 = vpop.f32.mrb[0].mxu0
  %780 = vdwg.mxu0
  %v781 = vadd.f32 %v168, %v778
  %v782 = vxor.u32 %v781, 2147483648
  %v783 = vmul.f32 %v782, 1.442695
  %v784 = vpow.pop %v783
  %v785 = vadd.f32 %v784, 1.0
  %v786 = vrcp.pop %v785
  %v787 = vmul.f32 1.0, %v786
  %789 = vrot.lane.b32.xlu0 %v778, 64
  %v790 = vpop.permute.xlu0 %789
  %v792 = vmul.f32 %v787, %v790
  %794 = vrot.lane.b32.xlu0 %v792, 64
  %v795 = vpop.permute.xlu0 %794
  %v797 = vadd.f32 %v168, %v795
  %v798 = vtanh.pop %v797
  %v799 = vsub.f32 %v705, %v798
  %801 = vrot.lane.b32.xlu0 %v799, 96
  %v802 = vpop.permute.xlu0 %801
  %v804 = vmul.f32 %v787, %v802
  %806 = vrot.lane.b32.xlu0 %v804, 32
  %v807 = vpop.permute.xlu0 %806
  %v809 = vadd.f32 %v798, %v807
  %811 = vrot.lane.b32.xlu0 %v809, 64
  %v812 = vpop.permute.xlu0 %811
  %v813 = vsel %vm187, %v812, 0
  %815 = vmatprep.subr.mxu0 0.0
  %816 = vmatpush1.msra.mxu0 %v26
  %817 = vmatprep.subr.mxu0 0.0
  %818 = vmatpush1.msra.mxu0 %v27
  %819 = vmatprep.subr.mxu0 0.0
  %820 = vmatpush1.msra.mxu0 %v28
  %821 = vmatprep.subr.mxu0 0.0
  %822 = vmatpush1.msra.mxu0 %v29
  %823 = vmatprep.subr.mxu0 0.0
  %824 = vmatpush1.msra.mxu0 0.0
  %825 = vmatprep.subr.mxu0 0.0
  %826 = vmatpush1.msra.mxu0 0.0
  %827 = vmatprep.subr.mxu0 0.0
  %828 = vmatpush1.msra.mxu0 0.0
  %829 = vmatprep.subr.mxu0 0.0
  %830 = vmatpush1.msra.mxu0 0.0
  %831 = vmatprep.subr.mxu0 0.0
  %832 = vmatpush1.msra.mxu0 0.0
  %833 = vmatprep.subr.mxu0 0.0
  %834 = vmatpush1.msra.mxu0 0.0
  %835 = vmatprep.subr.mxu0 0.0
  %836 = vmatpush1.msra.mxu0 0.0
  %837 = vmatprep.subr.mxu0 0.0
  %838 = vmatpush1.msra.mxu0 0.0
  %839 = vmatprep.subr.mxu0 0.0
  %840 = vmatpush1.msra.mxu0 0.0
  %841 = vmatprep.subr.mxu0 0.0
  %842 = vmatpush1.msra.mxu0 0.0
  %843 = vmatprep.subr.mxu0 0.0
  %844 = vmatpush1.msra.mxu0 0.0
  %845 = vmatprep.subr.mxu0 0.0
  %846 = vmatpush1.msra.mxu0 0.0
  %847 = vmatprep.subr.mxu0 0.0
  %848 = vmatpush1.msra.mxu0 0.0
  %849 = vmatprep.subr.mxu0 0.0
  %850 = vmatpush1.msra.mxu0 0.0
  %851 = vmatprep.subr.mxu0 0.0
  %852 = vmatpush1.msra.mxu0 0.0
  %853 = vmatprep.subr.mxu0 0.0
  %854 = vmatpush1.msra.mxu0 0.0
  %855 = vmatprep.subr.mxu0 0.0
  %856 = vmatpush1.msra.mxu0 0.0
  %857 = vmatprep.subr.mxu0 0.0
  %858 = vmatpush1.msra.mxu0 0.0
  %859 = vmatprep.subr.mxu0 0.0
  %860 = vmatpush1.msra.mxu0 0.0
  %861 = vmatprep.subr.mxu0 0.0
  %862 = vmatpush1.msra.mxu0 0.0
  %863 = vmatprep.subr.mxu0 0.0
  %864 = vmatpush1.msra.mxu0 0.0
  %865 = vmatprep.subr.mxu0 0.0
  %866 = vmatpush1.msra.mxu0 0.0
  %867 = vmatprep.subr.mxu0 0.0
  %868 = vmatpush1.msra.mxu0 0.0
  %869 = vmatprep.subr.mxu0 0.0
  %870 = vmatpush1.msra.mxu0 0.0
  %871 = vmatprep.subr.mxu0 0.0
  %872 = vmatpush1.msra.mxu0 0.0
  %873 = vmatprep.subr.mxu0 0.0
  %874 = vmatpush1.msra.mxu0 0.0
  %875 = vmatprep.subr.mxu0 0.0
  %876 = vmatpush1.msra.mxu0 0.0
  %877 = vmatprep.subr.mxu0 0.0
  %878 = vmatpush1.msra.mxu0 0.0
  %879 = vmatprep.mubr.f32.mxu0 0.0
  %880 = vmatmul.mubr.f32.gmra.mrb[0].mxu0 %v813
  %v881 = vpop.f32.mrb[0].mxu0
  %v882 = vadd.f32 %v185, %v881
  %v883 = vpop.f32.mrb[0].mxu0
  %884 = vdwg.mxu0
  %v885 = vadd.f32 %v173, %v882
  %v886 = vxor.u32 %v885, 2147483648
  %v887 = vmul.f32 %v886, 1.442695
  %v888 = vpow.pop %v887
  %v889 = vadd.f32 %v888, 1.0
  %v890 = vrcp.pop %v889
  %v891 = vmul.f32 1.0, %v890
  %893 = vrot.lane.b32.xlu0 %v882, 64
  %v894 = vpop.permute.xlu0 %893
  %v896 = vmul.f32 %v891, %v894
  %898 = vrot.lane.b32.xlu0 %v896, 64
  %v899 = vpop.permute.xlu0 %898
  %v901 = vadd.f32 %v173, %v899
  %v902 = vtanh.pop %v901
  %v903 = vsub.f32 %v809, %v902
  %905 = vrot.lane.b32.xlu0 %v903, 96
  %v906 = vpop.permute.xlu0 %905
  %v908 = vmul.f32 %v891, %v906
  %910 = vrot.lane.b32.xlu0 %v908, 32
  %v911 = vpop.permute.xlu0 %910
  %v913 = vadd.f32 %v902, %v911
  %915 = vrot.lane.b32.xlu0 %v913, 64
  %v916 = vpop.permute.xlu0 %915
  %v917 = vsel %vm187, %v916, 0
  %919 = vmatprep.subr.mxu0 0.0
  %920 = vmatpush1.msra.mxu0 %v26
  %921 = vmatprep.subr.mxu0 0.0
  %922 = vmatpush1.msra.mxu0 %v27
  %923 = vmatprep.subr.mxu0 0.0
  %924 = vmatpush1.msra.mxu0 %v28
  %925 = vmatprep.subr.mxu0 0.0
  %926 = vmatpush1.msra.mxu0 %v29
  %927 = vmatprep.subr.mxu0 0.0
  %928 = vmatpush1.msra.mxu0 0.0
  %929 = vmatprep.subr.mxu0 0.0
  %930 = vmatpush1.msra.mxu0 0.0
  %931 = vmatprep.subr.mxu0 0.0
  %932 = vmatpush1.msra.mxu0 0.0
  %933 = vmatprep.subr.mxu0 0.0
  %934 = vmatpush1.msra.mxu0 0.0
  %935 = vmatprep.subr.mxu0 0.0
  %936 = vmatpush1.msra.mxu0 0.0
  %937 = vmatprep.subr.mxu0 0.0
  %938 = vmatpush1.msra.mxu0 0.0
  %939 = vmatprep.subr.mxu0 0.0
  %940 = vmatpush1.msra.mxu0 0.0
  %941 = vmatprep.subr.mxu0 0.0
  %942 = vmatpush1.msra.mxu0 0.0
  %943 = vmatprep.subr.mxu0 0.0
  %944 = vmatpush1.msra.mxu0 0.0
  %945 = vmatprep.subr.mxu0 0.0
  %946 = vmatpush1.msra.mxu0 0.0
  %947 = vmatprep.subr.mxu0 0.0
  %948 = vmatpush1.msra.mxu0 0.0
  %949 = vmatprep.subr.mxu0 0.0
  %950 = vmatpush1.msra.mxu0 0.0
  %951 = vmatprep.subr.mxu0 0.0
  %952 = vmatpush1.msra.mxu0 0.0
  %953 = vmatprep.subr.mxu0 0.0
  %954 = vmatpush1.msra.mxu0 0.0
  %955 = vmatprep.subr.mxu0 0.0
  %956 = vmatpush1.msra.mxu0 0.0
  %957 = vmatprep.subr.mxu0 0.0
  %958 = vmatpush1.msra.mxu0 0.0
  %959 = vmatprep.subr.mxu0 0.0
  %960 = vmatpush1.msra.mxu0 0.0
  %961 = vmatprep.subr.mxu0 0.0
  %962 = vmatpush1.msra.mxu0 0.0
  %963 = vmatprep.subr.mxu0 0.0
  %964 = vmatpush1.msra.mxu0 0.0
  %965 = vmatprep.subr.mxu0 0.0
  %966 = vmatpush1.msra.mxu0 0.0
  %967 = vmatprep.subr.mxu0 0.0
  %968 = vmatpush1.msra.mxu0 0.0
  %969 = vmatprep.subr.mxu0 0.0
  %970 = vmatpush1.msra.mxu0 0.0
  %971 = vmatprep.subr.mxu0 0.0
  %972 = vmatpush1.msra.mxu0 0.0
  %973 = vmatprep.subr.mxu0 0.0
  %974 = vmatpush1.msra.mxu0 0.0
  %975 = vmatprep.subr.mxu0 0.0
  %976 = vmatpush1.msra.mxu0 0.0
  %977 = vmatprep.subr.mxu0 0.0
  %978 = vmatpush1.msra.mxu0 0.0
  %979 = vmatprep.subr.mxu0 0.0
  %980 = vmatpush1.msra.mxu0 0.0
  %981 = vmatprep.subr.mxu0 0.0
  %982 = vmatpush1.msra.mxu0 0.0
  %983 = vmatprep.mubr.f32.mxu0 0.0
  %984 = vmatmul.mubr.f32.gmra.mrb[0].mxu0 %v917
  %v985 = vpop.f32.mrb[0].mxu0
  %v986 = vadd.f32 %v185, %v985
  %v987 = vpop.f32.mrb[0].mxu0
  %988 = vdwg.mxu0
  %v989 = vadd.f32 %v178, %v986
  %v990 = vxor.u32 %v989, 2147483648
  %v991 = vmul.f32 %v990, 1.442695
  %v992 = vpow.pop %v991
  %v993 = vadd.f32 %v992, 1.0
  %v994 = vrcp.pop %v993
  %v995 = vmul.f32 1.0, %v994
  %997 = vrot.lane.b32.xlu0 %v986, 64
  %v998 = vpop.permute.xlu0 %997
  %v1000 = vmul.f32 %v995, %v998
  %1002 = vrot.lane.b32.xlu0 %v1000, 64
  %v1003 = vpop.permute.xlu0 %1002
  %v1005 = vadd.f32 %v178, %v1003
  %v1006 = vtanh.pop %v1005
  %v1007 = vsub.f32 %v913, %v1006
  %1009 = vrot.lane.b32.xlu0 %v1007, 96
  %v1010 = vpop.permute.xlu0 %1009
  %v1012 = vmul.f32 %v995, %v1010
  %1014 = vrot.lane.b32.xlu0 %v1012, 32
  %v1015 = vpop.permute.xlu0 %1014
  %v1017 = vadd.f32 %v1006, %v1015
  %v1018 = vld [vmem:[%s5] sm:$0xff]
  %v1019 = vld [vmem:[%s5 + $0x8] sm:$0xff]
  %v1020 = vld [vmem:[%s5 + $0x10] sm:$0xff]
  %v1021 = vld [vmem:[%s5 + $0x18] sm:$0xff]
  %v1022 = vld [vmem:[%s6] sm:$0x1]
  %v1024 = vlaneseq
  %v1025 = vshrl.u32 %v1024, 7
  %v1026 = vsub.s32 0, %v1025
  %v1027 = vrot.slane %v1022, %v1026
  %1030 = vrot.lane.b32.xlu0 %v1017, 64
  %v1031 = vpop.permute.xlu0 %1030
  %v1032 = vsel %vm187, %v1031, 0
  %1034 = vmatprep.subr.mxu0 0.0
  %1035 = vmatpush1.msra.mxu0 %v1018
  %1036 = vmatprep.subr.mxu0 0.0
  %1037 = vmatpush1.msra.mxu0 %v1019
  %1038 = vmatprep.subr.mxu0 0.0
  %1039 = vmatpush1.msra.mxu0 %v1020
  %1040 = vmatprep.subr.mxu0 0.0
  %1041 = vmatpush1.msra.mxu0 %v1021
  %1042 = vmatprep.subr.mxu0 0.0
  %1043 = vmatpush1.msra.mxu0 0.0
  %1044 = vmatprep.subr.mxu0 0.0
  %1045 = vmatpush1.msra.mxu0 0.0
  %1046 = vmatprep.subr.mxu0 0.0
  %1047 = vmatpush1.msra.mxu0 0.0
  %1048 = vmatprep.subr.mxu0 0.0
  %1049 = vmatpush1.msra.mxu0 0.0
  %1050 = vmatprep.subr.mxu0 0.0
  %1051 = vmatpush1.msra.mxu0 0.0
  %1052 = vmatprep.subr.mxu0 0.0
  %1053 = vmatpush1.msra.mxu0 0.0
  %1054 = vmatprep.subr.mxu0 0.0
  %1055 = vmatpush1.msra.mxu0 0.0
  %1056 = vmatprep.subr.mxu0 0.0
  %1057 = vmatpush1.msra.mxu0 0.0
  %1058 = vmatprep.subr.mxu0 0.0
  %1059 = vmatpush1.msra.mxu0 0.0
  %1060 = vmatprep.subr.mxu0 0.0
  %1061 = vmatpush1.msra.mxu0 0.0
  %1062 = vmatprep.subr.mxu0 0.0
  %1063 = vmatpush1.msra.mxu0 0.0
  %1064 = vmatprep.subr.mxu0 0.0
  %1065 = vmatpush1.msra.mxu0 0.0
  %1066 = vmatprep.subr.mxu0 0.0
  %1067 = vmatpush1.msra.mxu0 0.0
  %1068 = vmatprep.subr.mxu0 0.0
  %1069 = vmatpush1.msra.mxu0 0.0
  %1070 = vmatprep.subr.mxu0 0.0
  %1071 = vmatpush1.msra.mxu0 0.0
  %1072 = vmatprep.subr.mxu0 0.0
  %1073 = vmatpush1.msra.mxu0 0.0
  %1074 = vmatprep.subr.mxu0 0.0
  %1075 = vmatpush1.msra.mxu0 0.0
  %1076 = vmatprep.subr.mxu0 0.0
  %1077 = vmatpush1.msra.mxu0 0.0
  %1078 = vmatprep.subr.mxu0 0.0
  %1079 = vmatpush1.msra.mxu0 0.0
  %1080 = vmatprep.subr.mxu0 0.0
  %1081 = vmatpush1.msra.mxu0 0.0
  %1082 = vmatprep.subr.mxu0 0.0
  %1083 = vmatpush1.msra.mxu0 0.0
  %1084 = vmatprep.subr.mxu0 0.0
  %1085 = vmatpush1.msra.mxu0 0.0
  %1086 = vmatprep.subr.mxu0 0.0
  %1087 = vmatpush1.msra.mxu0 0.0
  %1088 = vmatprep.subr.mxu0 0.0
  %1089 = vmatpush1.msra.mxu0 0.0
  %1090 = vmatprep.subr.mxu0 0.0
  %1091 = vmatpush1.msra.mxu0 0.0
  %1092 = vmatprep.subr.mxu0 0.0
  %1093 = vmatpush1.msra.mxu0 0.0
  %1094 = vmatprep.subr.mxu0 0.0
  %1095 = vmatpush1.msra.mxu0 0.0
  %1096 = vmatprep.subr.mxu0 0.0
  %1097 = vmatpush1.msra.mxu0 0.0
  %1098 = vmatprep.mubr.f32.mxu0 0.0
  %1099 = vmatmul.mubr.f32.gmra.mrb[0].mxu0 %v1032
  %v1100 = vpop.f32.mrb[0].mxu0
  %v1101 = vadd.f32 %v1027, %v1100
  %v1102 = vpop.f32.mrb[0].mxu0
  %1103 = vdwg.mxu0
  %1104 = vst [vmem:[%s7] sm:$0xff] %v1101
  // Predicated region
  $region30: #{gru_model_forward.1} parent=0 // pred_check
    _
  $region31: #{gru_model_forward.1} parent=0 // pred_check_branch
    %1106 = sbr.rel (0) target = $region33
  $region32: #{gru_model_forward.1} parent=0 // pred_region
    _
  $region33: #{gru_model_forward.1} parent=0 // pred_fallthru
    _
  // Predicated region
  $region34: #{gru_model_forward.1} parent=0 // pred_check
    _
  $region35: #{gru_model_forward.1} parent=0 // pred_check_branch
    %1108 = sbr.rel (0) target = $region37
  $region36: #{gru_model_forward.1} parent=0 // pred_region
    _
  $region37: #{gru_model_forward.1} parent=0 // pred_fallthru
    _

</llo_original>
